<compile_context>
chip_gen: v5e
topology: v5e:2x2
jax: 0.10.0
libtpu: 0.0.40
codegen_flags: <defaults>
</compile_context>

<pallas_src>
import math

import jax
import jax.numpy as jnp
from jax import lax
from jax.experimental import pallas as pl
from jax.experimental.pallas import tpu as pltpu


def _attention_film_kernel(x_ref, spt_ref, wx_ref, wspt_ref, wagg_ref, b_ref,
                           out_ref):
    x = x_ref[...]                         # (1, C, HW)  -- this grid step's batch
    spt = spt_ref[...]                     # (N, C)
    C = spt.shape[1]

    # proto_x = x.mean(axis=3).mean(axis=2) == mean over all spatial positions
    proto_x = jnp.mean(x, axis=-1)         # (1, C)

    # Fused matmul 1: [query*1/sqrt(C) | film_x] = proto_x @ w_x   (C, 3C)
    qf = jnp.dot(proto_x, wx_ref[...], preferred_element_type=jnp.float32)  # (1, 3C)
    query = qf[:, :C]                      # (1, C), scale already folded in
    film_x = qf[:, C:]                     # (1, 2C)

    # Fused matmul 2: [key | value] = spt @ w_spt   (C, 2C)
    kv = jnp.dot(spt, wspt_ref[...], preferred_element_type=jnp.float32)    # (N, 2C)
    key = kv[:, :C]                        # (N, C)
    value = kv[:, C:]                      # (N, C)

    # correlation = query @ key.T, softmax over the N support prototypes
    corr = lax.dot_general(query, key, (((1,), (1,)), ((), ())),
                           preferred_element_type=jnp.float32)              # (1, N)
    corr = corr - jnp.max(corr, axis=-1, keepdims=True)
    p = jnp.exp(corr)
    p = p * pl.reciprocal(jnp.sum(p, axis=-1, keepdims=True), approx=True)

    # aggregated_messages = softmax(corr) @ value
    agg = jnp.dot(p, value, preferred_element_type=jnp.float32)             # (1, C)

    # Fused matmul 3 + split: fc_update(cat([proto_x, agg])) = film_x + agg@w_agg + b
    film = (film_x
            + jnp.dot(agg, wagg_ref[...], preferred_element_type=jnp.float32)
            + b_ref[...])                                                   # (1, 2C)
    gamma = film[:, :C][:, :, None]        # (1, C, 1)  (hoisted broadcast shape)
    beta = film[:, C:][:, :, None]         # (1, C, 1)

    # FiLM: gamma * x + beta, broadcast over the lane-dense spatial axis
    out_ref[...] = gamma * x + beta


def attention_module_forward(x, proto_spt, params):
    """x: (B, C, H, W) NCHW float32; proto_spt: (N, C). Returns (B, C, H, W)."""
    B, C, H, W = x.shape
    HW = H * W
    N = proto_spt.shape[0]
    x_flat = x.reshape(B, C, HW)

    wq, wk, wv = params["wq"], params["wk"], params["wv"]
    wu, bu = params["wu"], params["bu"]    # (2C, 2C), (2C,)

    # Pre-transpose to (in, out) layout and fuse weight blocks in the wrapper.
    scale = 1.0 / math.sqrt(C)
    wu_t = wu.T                            # (2C, 2C): rows = input feature, cols = output
    w_x = jnp.concatenate([wq.T * scale, wu_t[:C, :]], axis=1)   # (C, 3C)
    w_spt = jnp.concatenate([wk.T, wv.T], axis=1)                # (C, 2C)
    w_agg = wu_t[C:, :]                                          # (C, 2C)
    b_film = bu.reshape(1, 2 * C)                                # (1, 2C)

    out_flat = pl.pallas_call(
        _attention_film_kernel,
        out_shape=jax.ShapeDtypeStruct((B, C, HW), x.dtype),
        grid=(B,),
        in_specs=[
            pl.BlockSpec((1, C, HW), lambda b: (b, 0, 0)),       # x: per-batch block
            pl.BlockSpec((N, C), lambda b: (0, 0)),              # proto_spt: resident
            pl.BlockSpec((C, 3 * C), lambda b: (0, 0)),          # fused query/film_x weight
            pl.BlockSpec((C, 2 * C), lambda b: (0, 0)),          # fused key/value weight
            pl.BlockSpec((C, 2 * C), lambda b: (0, 0)),          # fused film_agg weight
            pl.BlockSpec((1, 2 * C), lambda b: (0, 0)),          # fc_update bias
        ],
        out_specs=pl.BlockSpec((1, C, HW), lambda b: (b, 0, 0)),
        compiler_params=pltpu.CompilerParams(
            dimension_semantics=("parallel",)),                   # megacore on v7x
    )(x_flat, proto_spt, w_x, w_spt, w_agg, b_film)
    return out_flat.reshape(B, C, H, W)


def _reference(x, proto_spt, params):
    """Pure-JAX mirror of the PyTorch forward (for correctness check)."""
    C = params["wq"].shape[0]
    proto_x = x.mean(axis=3).mean(axis=2)
    query = proto_x @ params["wq"].T
    key = proto_spt @ params["wk"].T
    value = proto_spt @ params["wv"].T
    corr = (query @ key.T) / math.sqrt(C)
    corr = jax.nn.softmax(corr, axis=-1)
    agg = corr @ value
    film = jnp.concatenate([proto_x, agg], axis=-1) @ params["wu"].T + params["bu"]
    gamma = film[:, :C][:, :, None, None]
    beta = film[:, C:][:, :, None, None]
    return gamma * x + beta


def _init_params(key, hidden_size):
    """Deterministic init mimicking torch.nn.Linear default (uniform +/- 1/sqrt(in))."""
    ks = jax.random.split(key, 5)
    lim = 1.0 / math.sqrt(hidden_size)
    lim2 = 1.0 / math.sqrt(2 * hidden_size)
    return {
        "wq": jax.random.uniform(ks[0], (hidden_size, hidden_size), jnp.float32, -lim, lim),
        "wk": jax.random.uniform(ks[1], (hidden_size, hidden_size), jnp.float32, -lim, lim),
        "wv": jax.random.uniform(ks[2], (hidden_size, hidden_size), jnp.float32, -lim, lim),
        "wu": jax.random.uniform(ks[3], (2 * hidden_size, 2 * hidden_size), jnp.float32, -lim2, lim2),
        "bu": jax.random.uniform(ks[4], (2 * hidden_size,), jnp.float32, -lim2, lim2),
    }


if __name__ == "__main__":
    key = jax.random.PRNGKey(0)
    k_x, k_spt, k_p = jax.random.split(key, 3)

    B, C, H, W = 2, 32, 16, 16       # hidden_size = C = 32
    N = 8                            # number of support prototypes

    x = jax.random.normal(k_x, (B, C, H, W), jnp.float32)
    proto_spt = jax.random.normal(k_spt, (N, C), jnp.float32)
    params = _init_params(k_p, C)

    out = attention_module_forward(x, proto_spt, params)
    out = jax.block_until_ready(out)

    ref = _reference(x, proto_spt, params)
    assert out.shape == (B, C, H, W)
    # Tolerance covers the approximate EUP reciprocal in the softmax denominator.
    assert jnp.allclose(out, ref, atol=2e-3, rtol=2e-3)

    print("KERNEL_OK")
</pallas_src>

<mosaic_0001>
module attributes {stable_mosaic.version = 11 : i64} {
  func.func @_attention_film_kernel(%arg0: i32, %arg1: memref<1x32x256xf32, #tpu.memory_space<vmem>>, %arg2: memref<8x32xf32, #tpu.memory_space<vmem>>, %arg3: memref<32x96xf32, #tpu.memory_space<vmem>>, %arg4: memref<32x64xf32, #tpu.memory_space<vmem>>, %arg5: memref<32x64xf32, #tpu.memory_space<vmem>>, %arg6: memref<1x64xf32, #tpu.memory_space<vmem>>, %arg7: memref<1x32x256xf32, #tpu.memory_space<vmem>>) attributes {dimension_semantics = [#tpu.dimension_semantics<parallel>], iteration_bounds = array<i64: 2>, scalar_prefetch = 0 : i64, scratch_operands = 0 : i64, tpu.core_type = #tpu.core_type<tc>, window_params = [{transform_indices = @transform_0, window_bounds = array<i64: 1, 32, 256>}, {pipeline_mode = #tpu.pipeline_mode<synchronous>, transform_indices = @transform_1, window_bounds = array<i64: 8, 32>}, {pipeline_mode = #tpu.pipeline_mode<synchronous>, transform_indices = @transform_2, window_bounds = array<i64: 32, 96>}, {pipeline_mode = #tpu.pipeline_mode<synchronous>, transform_indices = @transform_3, window_bounds = array<i64: 32, 64>}, {pipeline_mode = #tpu.pipeline_mode<synchronous>, transform_indices = @transform_4, window_bounds = array<i64: 32, 64>}, {pipeline_mode = #tpu.pipeline_mode<synchronous>, transform_indices = @transform_5, window_bounds = array<i64: 1, 64>}, {transform_indices = @transform_6, window_bounds = array<i64: 1, 32, 256>}]} {
    %c0 = arith.constant 0 : index
    %c0_0 = arith.constant 0 : index
    %c0_1 = arith.constant 0 : index
    %0 = vector.load %arg1[%c0, %c0_0, %c0_1] : memref<1x32x256xf32, #tpu.memory_space<vmem>>, vector<1x32x256xf32>
    %c0_2 = arith.constant 0 : index
    %c0_3 = arith.constant 0 : index
    %1 = vector.load %arg2[%c0_2, %c0_3] : memref<8x32xf32, #tpu.memory_space<vmem>>, vector<8x32xf32>
    %cst = arith.constant dense<0.000000e+00> : vector<1x32xf32>
    %2 = vector.multi_reduction <add>, %0, %cst [2] : vector<1x32x256xf32> to vector<1x32xf32>
    %cst_4 = arith.constant 2.560000e+02 : f32
    %3 = vector.broadcast %cst_4 : f32 to vector<1x32xf32>
    %4 = arith.divf %2, %3 : vector<1x32xf32>
    %c0_5 = arith.constant 0 : index
    %c0_6 = arith.constant 0 : index
    %5 = vector.load %arg3[%c0_5, %c0_6] : memref<32x96xf32, #tpu.memory_space<vmem>>, vector<32x96xf32>
    %cst_7 = arith.constant dense<0.000000e+00> : vector<1x96xf32>
    %6 = tpu.matmul %4, %5, %cst_7 {dimension_numbers = #tpu.dot_dimension_numbers<[1], [0], [0], [1], [0, 0, 1, 1], [], []>} : vector<1x32xf32>, vector<32x96xf32>, vector<1x96xf32> -> vector<1x96xf32>
    %7 = vector.extract_strided_slice %6 {offsets = [0, 0], sizes = [1, 32], strides = [1, 1]} : vector<1x96xf32> to vector<1x32xf32>
    %8 = vector.extract_strided_slice %6 {offsets = [0, 32], sizes = [1, 64], strides = [1, 1]} : vector<1x96xf32> to vector<1x64xf32>
    %c0_8 = arith.constant 0 : index
    %c0_9 = arith.constant 0 : index
    %9 = vector.load %arg4[%c0_8, %c0_9] : memref<32x64xf32, #tpu.memory_space<vmem>>, vector<32x64xf32>
    %cst_10 = arith.constant dense<0.000000e+00> : vector<8x64xf32>
    %10 = tpu.matmul %1, %9, %cst_10 {dimension_numbers = #tpu.dot_dimension_numbers<[1], [0], [0], [1], [0, 0, 1, 1], [], []>} : vector<8x32xf32>, vector<32x64xf32>, vector<8x64xf32> -> vector<8x64xf32>
    %11 = vector.extract_strided_slice %10 {offsets = [0, 0], sizes = [8, 32], strides = [1, 1]} : vector<8x64xf32> to vector<8x32xf32>
    %12 = vector.extract_strided_slice %10 {offsets = [0, 32], sizes = [8, 32], strides = [1, 1]} : vector<8x64xf32> to vector<8x32xf32>
    %cst_11 = arith.constant dense<0.000000e+00> : vector<1x8xf32>
    %13 = tpu.matmul %7, %11, %cst_11 {dimension_numbers = #tpu.dot_dimension_numbers<[1], [1], [0], [0], [0, 0, 1, 0], [], []>} : vector<1x32xf32>, vector<8x32xf32>, vector<1x8xf32> -> vector<1x8xf32>
    %cst_12 = arith.constant dense<0xFF800000> : vector<1xf32>
    %14 = vector.multi_reduction <maximumf>, %13, %cst_12 [1] : vector<1x8xf32> to vector<1xf32>
    %15 = vector.shape_cast %14 : vector<1xf32> to vector<1x1xf32>
    %16 = vector.broadcast %15 : vector<1x1xf32> to vector<1x8xf32>
    %17 = arith.subf %13, %16 : vector<1x8xf32>
    %18 = math.exp %17 : vector<1x8xf32>
    %cst_13 = arith.constant dense<0.000000e+00> : vector<1xf32>
    %19 = vector.multi_reduction <add>, %18, %cst_13 [1] : vector<1x8xf32> to vector<1xf32>
    %20 = vector.shape_cast %19 : vector<1xf32> to vector<1x1xf32>
    %21 = tpu.reciprocal %20 {approx = true} : vector<1x1xf32> -> vector<1x1xf32>
    %22 = vector.broadcast %21 : vector<1x1xf32> to vector<1x8xf32>
    %23 = arith.mulf %18, %22 : vector<1x8xf32>
    %cst_14 = arith.constant dense<0.000000e+00> : vector<1x32xf32>
    %24 = tpu.matmul %23, %12, %cst_14 {dimension_numbers = #tpu.dot_dimension_numbers<[1], [0], [0], [1], [0, 0, 1, 1], [], []>} : vector<1x8xf32>, vector<8x32xf32>, vector<1x32xf32> -> vector<1x32xf32>
    %c0_15 = arith.constant 0 : index
    %c0_16 = arith.constant 0 : index
    %25 = vector.load %arg5[%c0_15, %c0_16] : memref<32x64xf32, #tpu.memory_space<vmem>>, vector<32x64xf32>
    %cst_17 = arith.constant dense<0.000000e+00> : vector<1x64xf32>
    %26 = tpu.matmul %24, %25, %cst_17 {dimension_numbers = #tpu.dot_dimension_numbers<[1], [0], [0], [1], [0, 0, 1, 1], [], []>} : vector<1x32xf32>, vector<32x64xf32>, vector<1x64xf32> -> vector<1x64xf32>
    %27 = arith.addf %8, %26 : vector<1x64xf32>
    %c0_18 = arith.constant 0 : index
    %c0_19 = arith.constant 0 : index
    %28 = vector.load %arg6[%c0_18, %c0_19] : memref<1x64xf32, #tpu.memory_space<vmem>>, vector<1x64xf32>
    %29 = arith.addf %27, %28 : vector<1x64xf32>
    %30 = vector.extract_strided_slice %29 {offsets = [0, 0], sizes = [1, 32], strides = [1, 1]} : vector<1x64xf32> to vector<1x32xf32>
    %31 = vector.shape_cast %30 : vector<1x32xf32> to vector<1x32x1xf32>
    %32 = vector.extract_strided_slice %29 {offsets = [0, 32], sizes = [1, 32], strides = [1, 1]} : vector<1x64xf32> to vector<1x32xf32>
    %33 = vector.shape_cast %32 : vector<1x32xf32> to vector<1x32x1xf32>
    %34 = vector.broadcast %31 : vector<1x32x1xf32> to vector<1x32x256xf32>
    %35 = arith.mulf %34, %0 : vector<1x32x256xf32>
    %36 = vector.broadcast %33 : vector<1x32x1xf32> to vector<1x32x256xf32>
    %37 = arith.addf %35, %36 : vector<1x32x256xf32>
    %c0_20 = arith.constant 0 : index
    %c0_21 = arith.constant 0 : index
    %c0_22 = arith.constant 0 : index
    %38 = vector.load %arg7[%c0_20, %c0_21, %c0_22] : memref<1x32x256xf32, #tpu.memory_space<vmem>>, vector<1x32x256xf32>
    tpu.vector_store %arg7[%c0_20, %c0_21, %c0_22], %37 {strides = array<i32>} : memref<1x32x256xf32, #tpu.memory_space<vmem>>, vector<1x32x256xf32>,
    return
  }
  func.func @transform_0(%arg0: i32) -> (i32, i32, i32) {
    %c0_i32 = arith.constant 0 : i32
    %c0_i32_0 = arith.constant 0 : i32
    %c0_i32_1 = arith.constant 0 : i32
    return %arg0, %c0_i32, %c0_i32_0 : i32, i32, i32
  }
  func.func @transform_1(%arg0: i32) -> (i32, i32) {
    %c0_i32 = arith.constant 0 : i32
    %c0_i32_0 = arith.constant 0 : i32
    %c0_i32_1 = arith.constant 0 : i32
    return %c0_i32, %c0_i32_0 : i32, i32
  }
  func.func @transform_2(%arg0: i32) -> (i32, i32) {
    %c0_i32 = arith.constant 0 : i32
    %c0_i32_0 = arith.constant 0 : i32
    %c0_i32_1 = arith.constant 0 : i32
    return %c0_i32, %c0_i32_0 : i32, i32
  }
  func.func @transform_3(%arg0: i32) -> (i32, i32) {
    %c0_i32 = arith.constant 0 : i32
    %c0_i32_0 = arith.constant 0 : i32
    %c0_i32_1 = arith.constant 0 : i32
    return %c0_i32, %c0_i32_0 : i32, i32
  }
  func.func @transform_4(%arg0: i32) -> (i32, i32) {
    %c0_i32 = arith.constant 0 : i32
    %c0_i32_0 = arith.constant 0 : i32
    %c0_i32_1 = arith.constant 0 : i32
    return %c0_i32, %c0_i32_0 : i32, i32
  }
  func.func @transform_5(%arg0: i32) -> (i32, i32) {
    %c0_i32 = arith.constant 0 : i32
    %c0_i32_0 = arith.constant 0 : i32
    %c0_i32_1 = arith.constant 0 : i32
    return %c0_i32, %c0_i32_0 : i32, i32
  }
  func.func @transform_6(%arg0: i32) -> (i32, i32, i32) {
    %c0_i32 = arith.constant 0 : i32
    %c0_i32_0 = arith.constant 0 : i32
    %c0_i32_1 = arith.constant 0 : i32
    return %arg0, %c0_i32, %c0_i32_0 : i32, i32, i32
  }
}

</mosaic_0001>

<llo_original>
// kernel: tpu_custom_call.1
$region0: #{tpu_custom_call.1}
  #allocation0 [shape = 'u32[]', space=smem, size = 0x4, offset = 0x4, fixed_abs, tag = 'smem constant byte address 0x4 - core index']
  #allocation1 [shape = 'u32[72,128]{1,0:T(1,128)}', space=vmem, size = 0x9000, scoped, tag = 'internal scratch']
  %s0 = inlined_call_operand.hbm [shape: f32[2,32,256], index: 0, kind: input, shape index: {}]
  %s1 = inlined_call_operand.hbm [shape: f32[8,32], index: 1, kind: input, shape index: {}]
  %s2 = inlined_call_operand.hbm [shape: f32[32,96], index: 2, kind: input, shape index: {}]
  %s3 = inlined_call_operand.hbm [shape: f32[32,64], index: 3, kind: input, shape index: {}]
  %s4 = inlined_call_operand.hbm [shape: f32[32,64], index: 4, kind: input, shape index: {}]
  %s5 = inlined_call_operand.vmem [shape: f32[1,64], index: 5, kind: input, shape index: {}]
  %s6 = inlined_call_operand.hbm [shape: f32[2,32,256], index: 6, kind: output, shape index: {}]
  %s7 = sld [smem:[#allocation0]]
  $region77: #{tpu_custom_call.1} parent=0
    _
  %s9 = ssub.s32 1, %s7
  %s10 = scalar_select 0, %s9, %s7
  $region1: #{tpu_custom_call.1} parent=0
    #allocation2 [shape = 'u8[65536]{0}', space=vmem, size = 0x10000, scoped, tag = 'input window, operand 0']
    #allocation3 [shape = 's32[2]{0}', space=sflag, size = 0x8, scoped, tag = 'scoped memory for tpu_custom_call.1']
    #allocation4 [shape = 's32[2]{0}', space=sflag, size = 0x8, scoped, tag = 'scoped memory for tpu_custom_call.1']
    #allocation5 [shape = 'u8[4096]{0}', space=vmem, size = 0x1000, scoped, tag = 'input window, operand 1, single buffered']
    #allocation6 [shape = 's32[1]{0}', space=sflag, size = 0x4, scoped, tag = 'scoped memory for tpu_custom_call.1']
    #allocation7 [shape = 'u8[16384]{0}', space=vmem, size = 0x4000, scoped, tag = 'input window, operand 2, single buffered']
    #allocation8 [shape = 'u8[16384]{0}', space=vmem, size = 0x4000, scoped, tag = 'input window, operand 3, single buffered']
    #allocation9 [shape = 's32[1]{0}', space=sflag, size = 0x4, scoped, tag = 'scoped memory for tpu_custom_call.1']
    #allocation10 [shape = 'u8[16384]{0}', space=vmem, size = 0x4000, scoped, tag = 'input window, operand 4, single buffered']
    #allocation11 [shape = 'u8[65536]{0}', space=vmem, size = 0x10000, scoped, tag = 'output window, operand 0']
    %11 = vsyncpa [#allocation3], 0
    %s12 = scalar_lea.sflag [#allocation3], 1
    %13 = vsyncpa %s12, 0
    %14 = vsyncpa [#allocation6], 0
    %15 = vsyncpa [#allocation9], 0
    %16 = vsyncpa [#allocation4], 0
    %s17 = scalar_lea.sflag [#allocation4], 1
    %18 = vsyncpa %s17, 0
    loop: start=0, step=1, limit=4
    $region2: #{tpu_custom_call.1} parent=1 // loop_pre_header
      _
    $region3: #{tpu_custom_call.1} parent=1 // loop_header
      %s20 = sphi 0, %s24
      %p21 = scmp.ge.s32.totalorder %s20, 4
      %s30 = sphi 0, %s32
      %s33 = sphi 0, %s30
      %s34 = sphi 0, %s33
      %s50 = sphi 0, %s34
      %s54 = sphi 0, %s54
      %s56 = sphi 0, %s54
      %s57 = sphi 0, %s56
      %s71 = sphi 0, %s57
      %s75 = sphi 0, %s75
      %s77 = sphi 0, %s75
      %s78 = sphi 0, %s77
      %s92 = sphi 0, %s78
      %s96 = sphi 0, %s96
      %s98 = sphi 0, %s96
      %s99 = sphi 0, %s98
      %s113 = sphi 0, %s99
      %s117 = sphi 0, %s117
      %s119 = sphi 0, %s117
      %s120 = sphi 0, %s119
      %s134 = sphi 0, %s120
      %s138 = sphi 0, %s138
      %s140 = sphi 0, %s138
      %s141 = sphi 0, %s140
      %s155 = sphi 0, %s141
      %s161 = sphi 0, %s163
      %s164 = sphi 0, %s161
      %s165 = sphi 0, %s164
      %s181 = sphi 0, %s165
    $region4: #{tpu_custom_call.1} parent=1 // loop_header_branch
      %23 = sbr.rel (%p21) target = $region8
    $region5: #{tpu_custom_call.1} parent=1 // loop_body
      %s25 = ssub.s32 %s20, 1
      %s26 = ssub.s32 %s20, 2
      %s27 = sadd.s32 %s20, 1
      %s28 = ssub.s32 %s20, %s27
      %p29 = scmp.eq.s32.totalorder %s28, 0
      %s31 = sadd.s32 %s30, 1
      %s32 = scalar_select %p29, %s30, %s31
      %p35 = pneg %p29
      %p36 = scmp.eq.s32.totalorder %s20, 1
      %p37 = por %p35, %p36
      %p38 = scmp.ne.s32.totalorder %s30, %s33
      %p39 = scmp.eq.s32.totalorder %s20, 0
      %p40 = por %p38, %p39
      %p41 = scmp.ne.s32.totalorder %s30, %s33
      %p42 = scmp.eq.s32.totalorder %s25, 1
      %p43 = por %p41, %p42
      %p44 = scmp.ne.s32.totalorder %s33, %s34
      %p45 = scmp.eq.s32.totalorder %s25, 0
      %p46 = por %p44, %p45
      %p47 = scmp.ne.s32.totalorder %s33, %s34
      %p48 = scmp.eq.s32.totalorder %s26, 1
      %p49 = por %p47, %p48
      %p51 = scmp.ne.s32.totalorder %s34, %s50
      %p52 = scmp.eq.s32.totalorder %s26, 0
      %p53 = por %p51, %p52
      %s55 = sadd.s32 %s54, 1
      %p58 = scmp.eq.s32.totalorder %s20, 1
      %p59 = scmp.ne.s32.totalorder %s54, %s56
      %p60 = scmp.eq.s32.totalorder %s20, 0
      %p61 = por %p59, %p60
      %p62 = scmp.ne.s32.totalorder %s54, %s56
      %p63 = scmp.eq.s32.totalorder %s25, 1
      %p64 = por %p62, %p63
      %p65 = scmp.ne.s32.totalorder %s56, %s57
      %p66 = scmp.eq.s32.totalorder %s25, 0
      %p67 = por %p65, %p66
      %p68 = scmp.ne.s32.totalorder %s56, %s57
      %p69 = scmp.eq.s32.totalorder %s26, 1
      %p70 = por %p68, %p69
      %p72 = scmp.ne.s32.totalorder %s57, %s71
      %p73 = scmp.eq.s32.totalorder %s26, 0
      %p74 = por %p72, %p73
      %s76 = sadd.s32 %s75, 1
      %p79 = scmp.eq.s32.totalorder %s20, 1
      %p80 = scmp.ne.s32.totalorder %s75, %s77
      %p81 = scmp.eq.s32.totalorder %s20, 0
      %p82 = por %p80, %p81
      %p83 = scmp.ne.s32.totalorder %s75, %s77
      %p84 = scmp.eq.s32.totalorder %s25, 1
      %p85 = por %p83, %p84
      %p86 = scmp.ne.s32.totalorder %s77, %s78
      %p87 = scmp.eq.s32.totalorder %s25, 0
      %p88 = por %p86, %p87
      %p89 = scmp.ne.s32.totalorder %s77, %s78
      %p90 = scmp.eq.s32.totalorder %s26, 1
      %p91 = por %p89, %p90
      %p93 = scmp.ne.s32.totalorder %s78, %s92
      %p94 = scmp.eq.s32.totalorder %s26, 0
      %p95 = por %p93, %p94
      %s97 = sadd.s32 %s96, 1
      %p100 = scmp.eq.s32.totalorder %s20, 1
      %p101 = scmp.ne.s32.totalorder %s96, %s98
      %p102 = scmp.eq.s32.totalorder %s20, 0
      %p103 = por %p101, %p102
      %p104 = scmp.ne.s32.totalorder %s96, %s98
      %p105 = scmp.eq.s32.totalorder %s25, 1
      %p106 = por %p104, %p105
      %p107 = scmp.ne.s32.totalorder %s98, %s99
      %p108 = scmp.eq.s32.totalorder %s25, 0
      %p109 = por %p107, %p108
      %p110 = scmp.ne.s32.totalorder %s98, %s99
      %p111 = scmp.eq.s32.totalorder %s26, 1
      %p112 = por %p110, %p111
      %p114 = scmp.ne.s32.totalorder %s99, %s113
      %p115 = scmp.eq.s32.totalorder %s26, 0
      %p116 = por %p114, %p115
      %s118 = sadd.s32 %s117, 1
      %p121 = scmp.eq.s32.totalorder %s20, 1
      %p122 = scmp.ne.s32.totalorder %s117, %s119
      %p123 = scmp.eq.s32.totalorder %s20, 0
      %p124 = por %p122, %p123
      %p125 = scmp.ne.s32.totalorder %s117, %s119
      %p126 = scmp.eq.s32.totalorder %s25, 1
      %p127 = por %p125, %p126
      %p128 = scmp.ne.s32.totalorder %s119, %s120
      %p129 = scmp.eq.s32.totalorder %s25, 0
      %p130 = por %p128, %p129
      %p131 = scmp.ne.s32.totalorder %s119, %s120
      %p132 = scmp.eq.s32.totalorder %s26, 1
      %p133 = por %p131, %p132
      %p135 = scmp.ne.s32.totalorder %s120, %s134
      %p136 = scmp.eq.s32.totalorder %s26, 0
      %p137 = por %p135, %p136
      %s139 = sadd.s32 %s138, 1
      %p142 = scmp.eq.s32.totalorder %s20, 1
      %p143 = scmp.ne.s32.totalorder %s138, %s140
      %p144 = scmp.eq.s32.totalorder %s20, 0
      %p145 = por %p143, %p144
      %p146 = scmp.ne.s32.totalorder %s138, %s140
      %p147 = scmp.eq.s32.totalorder %s25, 1
      %p148 = por %p146, %p147
      %p149 = scmp.ne.s32.totalorder %s140, %s141
      %p150 = scmp.eq.s32.totalorder %s25, 0
      %p151 = por %p149, %p150
      %p152 = scmp.ne.s32.totalorder %s140, %s141
      %p153 = scmp.eq.s32.totalorder %s26, 1
      %p154 = por %p152, %p153
      %p156 = scmp.ne.s32.totalorder %s141, %s155
      %p157 = scmp.eq.s32.totalorder %s26, 0
      %p158 = por %p156, %p157
      %s159 = ssub.s32 %s20, %s27
      %p160 = scmp.eq.s32.totalorder %s159, 0
      %s162 = sadd.s32 %s161, 1
      %s163 = scalar_select %p160, %s161, %s162
      %p166 = pneg %p160
      %p167 = scmp.eq.s32.totalorder %s20, 1
      %p168 = por %p166, %p167
      %p169 = scmp.ne.s32.totalorder %s161, %s164
      %p170 = scmp.eq.s32.totalorder %s20, 0
      %p171 = por %p169, %p170
      %p172 = scmp.ne.s32.totalorder %s161, %s164
      %p173 = scmp.eq.s32.totalorder %s25, 1
      %p174 = por %p172, %p173
      %p175 = scmp.ne.s32.totalorder %s164, %s165
      %p176 = scmp.eq.s32.totalorder %s25, 0
      %p177 = por %p175, %p176
      %p178 = scmp.ne.s32.totalorder %s164, %s165
      %p179 = scmp.eq.s32.totalorder %s26, 1
      %p180 = por %p178, %p179
      %p182 = scmp.ne.s32.totalorder %s165, %s181
      %p183 = scmp.eq.s32.totalorder %s26, 0
      %p184 = por %p182, %p183
      %p185 = scmp.le.s32.totalorder 1, %s20
      %p186 = scmp.lt.s32.totalorder %s20, 3
      %p187 = pnand %p185, %p186
      %p188 = pneg %p187
      // Predicated region
      $region9: #{tpu_custom_call.1} parent=5 // pred_check
        _
      $region10: #{tpu_custom_call.1} parent=5 // pred_check_branch
        %190 = sbr.rel (%p187) target = $region12
      $region11: #{tpu_custom_call.1} parent=5 // pred_region
        %s191 = ssub.s32 %s20, 1
        // Predicated region
        $region13: #{tpu_custom_call.1} parent=11 // pred_check
          %p192 = pneg %p67
        $region14: #{tpu_custom_call.1} parent=11 // pred_check_branch
          %194 = sbr.rel (%p192) target = $region16
        $region15: #{tpu_custom_call.1} parent=11 // pred_region
          %196 = vsyncadd [#allocation6], 0
          %s198 = sshll.u32 %s1, 4
          %s199 = int_to_ptr.hbm [resolvable:$true] %s198
          %s200 = sshll.u32 [#allocation5], 4
          %s201 = int_to_ptr.vmem [resolvable:$true] %s200
          %203 = dma.hbm_to_vmem [thread:$0]  %s199, 128, %s201, [#allocation6]
        $region16: #{tpu_custom_call.1} parent=11 // pred_fallthru
          _
        // Predicated region
        $region17: #{tpu_custom_call.1} parent=11 // pred_check
          %p204 = pneg %p88
        $region18: #{tpu_custom_call.1} parent=11 // pred_check_branch
          %206 = sbr.rel (%p204) target = $region20
        $region19: #{tpu_custom_call.1} parent=11 // pred_region
          %208 = vsyncadd [#allocation6], 0
          %s209 = sshll.u32 %s2, 4
          %s210 = int_to_ptr.hbm [resolvable:$true] %s209
          %s211 = sshll.u32 [#allocation7], 4
          %s212 = int_to_ptr.vmem [resolvable:$true] %s211
          %217 = dma.hbm_to_vmem [thread:$0]  %s210, 512, %s212, [#allocation6], 128, 128, 8
        $region20: #{tpu_custom_call.1} parent=11 // pred_fallthru
          _
        // Predicated region
        $region21: #{tpu_custom_call.1} parent=11 // pred_check
          %p218 = pneg %p109
        $region22: #{tpu_custom_call.1} parent=11 // pred_check_branch
          %220 = sbr.rel (%p218) target = $region24
        $region23: #{tpu_custom_call.1} parent=11 // pred_region
          %222 = vsyncadd [#allocation9], 0
          %s223 = sshll.u32 %s3, 4
          %s224 = int_to_ptr.hbm [resolvable:$true] %s223
          %s225 = sshll.u32 [#allocation8], 4
          %s226 = int_to_ptr.vmem [resolvable:$true] %s225
          %231 = dma.hbm_to_vmem [thread:$0]  %s224, 512, %s226, [#allocation9], 128, 128, 8
        $region24: #{tpu_custom_call.1} parent=11 // pred_fallthru
          _
        // Predicated region
        $region25: #{tpu_custom_call.1} parent=11 // pred_check
          %p232 = pneg %p130
        $region26: #{tpu_custom_call.1} parent=11 // pred_check_branch
          %234 = sbr.rel (%p232) target = $region28
        $region27: #{tpu_custom_call.1} parent=11 // pred_region
          %236 = vsyncadd [#allocation9], 0
          %s237 = sshll.u32 %s4, 4
          %s238 = int_to_ptr.hbm [resolvable:$true] %s237
          %s239 = sshll.u32 [#allocation10], 4
          %s240 = int_to_ptr.vmem [resolvable:$true] %s239
          %245 = dma.hbm_to_vmem [thread:$0]  %s238, 512, %s240, [#allocation9], 128, 128, 8
        $region28: #{tpu_custom_call.1} parent=11 // pred_fallthru
          _
        // Predicated region
        $region29: #{tpu_custom_call.1} parent=11 // pred_check
          %p246 = pneg %p151
        $region30: #{tpu_custom_call.1} parent=11 // pred_check_branch
          %248 = sbr.rel (%p246) target = $region32
        $region31: #{tpu_custom_call.1} parent=11 // pred_region
          _
        $region32: #{tpu_custom_call.1} parent=11 // pred_fallthru
          _
      $region12: #{tpu_custom_call.1} parent=5 // pred_fallthru
        _
      %p249 = scmp.lt.s32.totalorder %s20, 2
      // Predicated region
      $region33: #{tpu_custom_call.1} parent=5 // pred_check
        %p250 = pneg %p249
      $region34: #{tpu_custom_call.1} parent=5 // pred_check_branch
        %252 = sbr.rel (%p250) target = $region36
      $region35: #{tpu_custom_call.1} parent=5 // pred_region
        // Predicated region
        $region37: #{tpu_custom_call.1} parent=35 // pred_check
          %p253 = pneg %p40
        $region38: #{tpu_custom_call.1} parent=35 // pred_check_branch
          %255 = sbr.rel (%p253) target = $region40
        $region39: #{tpu_custom_call.1} parent=35 // pred_region
          %s256 = sand.u32 %s30, 1
          %s257 = scalar_lea.sflag [#allocation3], %s256
          %s258 = sand.u32 %s30, 1
          %s259 = smul.addr %s258, 64
          %s260 = scalar_lea.vmem [#allocation2], %s259
          %262 = vsyncadd %s257, 0
          %s263 = smul.addr %s20, 8
          %s264 = smul.addr %s263, 8
          %s265 = scalar_lea.hbm %s0, %s264
          %s266 = sshll.u32 %s265, 4
          %s267 = int_to_ptr.hbm [resolvable:$true] %s266
          %s268 = sshll.u32 %s260, 4
          %s269 = int_to_ptr.vmem [resolvable:$true] %s268
          %274 = dma.hbm_to_vmem [thread:$0]  %s267, 1024, %s269, %s257, 256, 256, 16
        $region40: #{tpu_custom_call.1} parent=35 // pred_fallthru
          _
      $region36: #{tpu_custom_call.1} parent=5 // pred_fallthru
        _
      %p275 = scmp.le.s32.totalorder 1, %s20
      %p276 = scmp.lt.s32.totalorder %s20, 3
      %p277 = pnand %p275, %p276
      %p278 = pneg %p277
      // Predicated region
      $region41: #{tpu_custom_call.1} parent=5 // pred_check
        _
      $region42: #{tpu_custom_call.1} parent=5 // pred_check_branch
        %280 = sbr.rel (%p277) target = $region44
      $region43: #{tpu_custom_call.1} parent=5 // pred_region
        %s281 = ssub.s32 %s20, 1
        %s282 = sand.u32 %s33, 1
        %s283 = scalar_lea.sflag [#allocation3], %s282
        %s284 = sand.u32 %s33, 1
        %s285 = smul.addr %s284, 64
        %s286 = scalar_lea.vmem [#allocation2], %s285
        // Predicated region
        $region45: #{tpu_custom_call.1} parent=43 // pred_check
          %p287 = pneg %p46
        $region46: #{tpu_custom_call.1} parent=43 // pred_check_branch
          %289 = sbr.rel (%p287) target = $region48
        $region47: #{tpu_custom_call.1} parent=43 // pred_region
          %291 = dma.done %s283, 1024
        $region48: #{tpu_custom_call.1} parent=43 // pred_fallthru
          _
        // Predicated region
        $region49: #{tpu_custom_call.1} parent=43 // pred_check
          %p292 = pneg %p67
        $region50: #{tpu_custom_call.1} parent=43 // pred_check_branch
          %294 = sbr.rel (%p292) target = $region52
        $region51: #{tpu_custom_call.1} parent=43 // pred_region
          %296 = dma.done [#allocation6], 128
        $region52: #{tpu_custom_call.1} parent=43 // pred_fallthru
          _
        // Predicated region
        $region53: #{tpu_custom_call.1} parent=43 // pred_check
          %p297 = pneg %p88
        $region54: #{tpu_custom_call.1} parent=43 // pred_check_branch
          %299 = sbr.rel (%p297) target = $region56
        $region55: #{tpu_custom_call.1} parent=43 // pred_region
          %301 = dma.done [#allocation6], 512
        $region56: #{tpu_custom_call.1} parent=43 // pred_fallthru
          _
        // Predicated region
        $region57: #{tpu_custom_call.1} parent=43 // pred_check
          %p302 = pneg %p109
        $region58: #{tpu_custom_call.1} parent=43 // pred_check_branch
          %304 = sbr.rel (%p302) target = $region60
        $region59: #{tpu_custom_call.1} parent=43 // pred_region
          %306 = dma.done [#allocation9], 512
        $region60: #{tpu_custom_call.1} parent=43 // pred_fallthru
          _
        // Predicated region
        $region61: #{tpu_custom_call.1} parent=43 // pred_check
          %p307 = pneg %p130
        $region62: #{tpu_custom_call.1} parent=43 // pred_check_branch
          %309 = sbr.rel (%p307) target = $region64
        $region63: #{tpu_custom_call.1} parent=43 // pred_region
          %311 = dma.done [#allocation9], 512
        $region64: #{tpu_custom_call.1} parent=43 // pred_fallthru
          _
        %s312 = sand.u32 %s33, 1
        %s313 = scalar_lea.sflag [#allocation3], %s312
        %s314 = sand.u32 %s33, 1
        %s315 = smul.addr %s314, 64
        %s316 = scalar_lea.vmem [#allocation2], %s315
        %p317 = pneg %p46
        %p318 = pneg %p43
        %p319 = pneg %p67
        %p320 = pneg %p64
        %p321 = pneg %p88
        %p322 = pneg %p85
        %p323 = pneg %p109
        %p324 = pneg %p106
        %p325 = pneg %p130
        %p326 = pneg %p127
        %p327 = pneg %p151
        %p328 = pneg %p148
        %p329 = pneg %p177
        %p330 = pneg %p174
        %s331 = sand.u32 %s164, 1
        %s332 = scalar_lea.sflag [#allocation4], %s331
        %s333 = sand.u32 %s164, 1
        %s334 = smul.addr %s333, 64
        %s335 = scalar_lea.vmem [#allocation11], %s334
        %v336 = vld [vmem:[%s286] sm:$0xff]
        %v337 = vld [vmem:[%s286 + $0x8] sm:$0xff]
        %v338 = vld [vmem:[%s286 + $0x10] sm:$0xff]
        %v339 = vld [vmem:[%s286 + $0x18] sm:$0xff]
        %v340 = vld [vmem:[%s286 + $0x20] sm:$0xff]
        %v341 = vld [vmem:[%s286 + $0x28] sm:$0xff]
        %v342 = vld [vmem:[%s286 + $0x30] sm:$0xff]
        %v343 = vld [vmem:[%s286 + $0x38] sm:$0xff]
        %v344 = vld [vmem:[#allocation5] sm:$0xff]
        %v345 = vadd.f32 %v336, %v337
        %346 = vadd.xlane.f32.xlu0 %v345
        %v347 = vpop.xlane.xlu0 %346
        %v348 = vadd.f32 %v338, %v339
        %349 = vadd.xlane.f32.xlu0 %v348
        %v350 = vpop.xlane.xlu0 %349
        %v351 = vadd.f32 %v340, %v341
        %352 = vadd.xlane.f32.xlu0 %v351
        %v353 = vpop.xlane.xlu0 %352
        %v354 = vadd.f32 %v342, %v343
        %355 = vadd.xlane.f32.xlu0 %v354
        %v356 = vpop.xlane.xlu0 %355
        %v357 = vrcp.pop 256.0
        %v358 = vmul.f32 256.0, %v357
        %v359 = vsub.f32 1.0, %v358
        %v360 = vmul.f32 %v357, %v359
        %v361 = vadd.f32 %v357, %v360
        %vm362 = vweird.f32 %v357
        %v363 = vsel %vm362, %v357, %v361
        %v364 = vmul.f32 %v347, %v363
        %v365 = vmul.f32 %v350, %v363
        %v366 = vmul.f32 %v353, %v363
        %v367 = vmul.f32 %v356, %v363
        %v368 = vld [vmem:[#allocation7] sm:$0xff]
        %v369 = vld [vmem:[#allocation7 + $0x8] sm:$0xff]
        %v370 = vld [vmem:[#allocation7 + $0x10] sm:$0xff]
        %v371 = vld [vmem:[#allocation7 + $0x18] sm:$0xff]
        %v376 = vlaneseq
        %v377 = vand.u32 %v376, 127
        %v378 = vperm.slane %v364, %v377
        %v379 = vadd.s32 %v377, 4294967288
        %v380 = vperm.slane %v365, %v379
        %vm381 = vcmask 130112
        %v382 = vsel %vm381, %v380, %v378
        %v383 = vadd.s32 %v377, 4294967280
        %v384 = vperm.slane %v366, %v383
        %vm385 = vcmask 195712
        %v386 = vsel %vm385, %v384, %v382
        %v387 = vadd.s32 %v377, 4294967272
        %v388 = vperm.slane %v367, %v387
        %vm389 = vcmask 261312
        %v390 = vsel %vm389, %v388, %v386
        %vm391 = vcmask 261120
        %v392 = vsel %vm391, %v390, 0
        %394 = vmatpush.msra.mxu0 0.0
        %395 = vmatpush.msra.mxu0 0.0
        %396 = vmatpush.msra.mxu0 0.0
        %397 = vmatpush.msra.mxu0 0.0
        %398 = vmatpush.msra.mxu0 0.0
        %399 = vmatpush.msra.mxu0 0.0
        %400 = vmatpush.msra.mxu0 0.0
        %401 = vmatpush.msra.mxu0 0.0
        %402 = vmatpush.msra.mxu0 0.0
        %403 = vmatpush.msra.mxu0 0.0
        %404 = vmatpush.msra.mxu0 0.0
        %405 = vmatpush.msra.mxu0 0.0
        %406 = vmatpush.msra.mxu0 %v371
        %407 = vmatpush.msra.mxu0 %v370
        %408 = vmatpush.msra.mxu0 %v369
        %409 = vmatpush.msra.mxu0 %v368
        %410 = vmatmul.f32.gmra.mxu0 %v392
        %v411 = vpop.f32.mrf.mxu0
        %v412 = vadd.f32 0.0, %v411
        %413 = vdwg.mxu0
        %v414 = vld [vmem:[#allocation8] sm:$0xff]
        %v415 = vld [vmem:[#allocation8 + $0x8] sm:$0xff]
        %v416 = vld [vmem:[#allocation8 + $0x10] sm:$0xff]
        %v417 = vld [vmem:[#allocation8 + $0x18] sm:$0xff]
        %v419 = vsel %vm391, %v344, 0
        %421 = vmatpush.msra.mxu0 0.0
        %422 = vmatpush.msra.mxu0 0.0
        %423 = vmatpush.msra.mxu0 0.0
        %424 = vmatpush.msra.mxu0 0.0
        %425 = vmatpush.msra.mxu0 0.0
        %426 = vmatpush.msra.mxu0 0.0
        %427 = vmatpush.msra.mxu0 0.0
        %428 = vmatpush.msra.mxu0 0.0
        %429 = vmatpush.msra.mxu0 0.0
        %430 = vmatpush.msra.mxu0 0.0
        %431 = vmatpush.msra.mxu0 0.0
        %432 = vmatpush.msra.mxu0 0.0
        %433 = vmatpush.msra.mxu0 %v417
        %434 = vmatpush.msra.mxu0 %v416
        %435 = vmatpush.msra.mxu0 %v415
        %436 = vmatpush.msra.mxu0 %v414
        %437 = vmatmul.f32.gmra.mxu0 %v419
        %v438 = vpop.f32.mrf.mxu0
        %v439 = vadd.f32 0.0, %v438
        %440 = vdwg.mxu0
        %v442 = vsel %vm391, %v412, 0
        %v445 = vsel %vm391, %v439, 0
        %447 = vmatpush.xpose.msra.mxu0 0.0
        %448 = vmatpush.xpose.msra.mxu0 0.0
        %449 = vmatpush.xpose.msra.mxu0 0.0
        %450 = vmatpush.xpose.msra.mxu0 0.0
        %451 = vmatpush.xpose.msra.mxu0 0.0
        %452 = vmatpush.xpose.msra.mxu0 0.0
        %453 = vmatpush.xpose.msra.mxu0 0.0
        %454 = vmatpush.xpose.msra.mxu0 0.0
        %455 = vmatpush.xpose.msra.mxu0 0.0
        %456 = vmatpush.xpose.msra.mxu0 0.0
        %457 = vmatpush.xpose.msra.mxu0 0.0
        %458 = vmatpush.xpose.msra.mxu0 0.0
        %459 = vmatpush.xpose.msra.mxu0 0.0
        %460 = vmatpush.xpose.msra.mxu0 0.0
        %461 = vmatpush.xpose.msra.mxu0 0.0
        %462 = vmatpush.xpose.msra.mxu0 %v445
        %463 = vmatmul.f32.gmra.mxu0 %v442
        %v464 = vpop.f32.mrf.mxu0
        %v465 = vadd.f32 0.0, %v464
        %466 = vdwg.mxu0
        %vm467 = vcmask 57344
        %v468 = vsel %vm467, %v465, -inf
        %469 = vmax.xlane.f32.xlu0 %v468
        %v470 = vpop.xlane.xlu0 %469
        %v471 = vsub.f32 %v465, %v470
        %v472 = vmul.f32 %v471, 1.442695
        %v473 = vpow.pop %v472
        %v474 = vsel %vm467, %v473, 0.0
        %475 = vadd.xlane.f32.xlu0 %v474
        %v476 = vpop.xlane.xlu0 %475
        %v477 = vrcp.pop %v476
        %v478 = vmul.f32 %v473, %v477
        %479 = vrot.lane.b32.xlu0 %v439, 96
        %v480 = vpop.permute.xlu0 %479
        %vm482 = vcmask 64512
        %v484 = vsel %vm482, %v478, 0
        %486 = vmatpush.msra.mxu0 0.0
        %487 = vmatpush.msra.mxu0 0.0
        %488 = vmatpush.msra.mxu0 0.0
        %489 = vmatpush.msra.mxu0 0.0
        %490 = vmatpush.msra.mxu0 0.0
        %491 = vmatpush.msra.mxu0 0.0
        %492 = vmatpush.msra.mxu0 0.0
        %493 = vmatpush.msra.mxu0 0.0
        %494 = vmatpush.msra.mxu0 0.0
        %495 = vmatpush.msra.mxu0 0.0
        %496 = vmatpush.msra.mxu0 0.0
        %497 = vmatpush.msra.mxu0 0.0
        %498 = vmatpush.msra.mxu0 0.0
        %499 = vmatpush.msra.mxu0 0.0
        %500 = vmatpush.msra.mxu0 0.0
        %501 = vmatpush.msra.mxu0 %v480
        %502 = vmatmul.f32.gmra.mxu0 %v484
        %v503 = vpop.f32.mrf.mxu0
        %v504 = vadd.f32 0.0, %v503
        %505 = vdwg.mxu0
        %v506 = vld [vmem:[#allocation10] sm:$0xff]
        %v507 = vld [vmem:[#allocation10 + $0x8] sm:$0xff]
        %v508 = vld [vmem:[#allocation10 + $0x10] sm:$0xff]
        %v509 = vld [vmem:[#allocation10 + $0x18] sm:$0xff]
        %v511 = vsel %vm391, %v504, 0
        %513 = vmatpush.msra.mxu0 0.0
        %514 = vmatpush.msra.mxu0 0.0
        %515 = vmatpush.msra.mxu0 0.0
        %516 = vmatpush.msra.mxu0 0.0
        %517 = vmatpush.msra.mxu0 0.0
        %518 = vmatpush.msra.mxu0 0.0
        %519 = vmatpush.msra.mxu0 0.0
        %520 = vmatpush.msra.mxu0 0.0
        %521 = vmatpush.msra.mxu0 0.0
        %522 = vmatpush.msra.mxu0 0.0
        %523 = vmatpush.msra.mxu0 0.0
        %524 = vmatpush.msra.mxu0 0.0
        %525 = vmatpush.msra.mxu0 %v509
        %526 = vmatpush.msra.mxu0 %v508
        %527 = vmatpush.msra.mxu0 %v507
        %528 = vmatpush.msra.mxu0 %v506
        %529 = vmatmul.f32.gmra.mxu0 %v511
        %v530 = vpop.f32.mrf.mxu0
        %v531 = vadd.f32 0.0, %v530
        %532 = vdwg.mxu0
        %534 = vrot.lane.b32.xlu0 %v531, 32
        %v535 = vpop.permute.xlu0 %534
        %v537 = vadd.f32 %v412, %v535
        %v538 = vld [vmem:[%s5] sm:$0x1]
        %v540 = vperm.slane %v538, 0
        %541 = vrot.lane.b32.xlu0 %v540, 32
        %v542 = vpop.permute.xlu0 %541
        %v544 = vadd.f32 %v537, %v542
        %v545 = vperm.slane %v544, 0
        %v546 = vlaneseq
        %v547 = vshrl.u32 %v546, 7
        %v548 = vadd.s32 %v547, 32
        %549 = vset.pattern.permute.xlu0 %v548
        %550 = vperm.xlu0 %549, %v545
        %v551 = vpop.permute.xlu0 %550
        %v552 = vlaneseq
        %v553 = vshrl.u32 %v552, 7
        %v554 = vadd.s32 %v553, 40
        %555 = vset.pattern.permute.xlu0 %v554
        %556 = vperm.xlu0 %555, %v545
        %v557 = vpop.permute.xlu0 %556
        %v558 = vlaneseq
        %v559 = vshrl.u32 %v558, 7
        %v560 = vadd.s32 %v559, 48
        %561 = vset.pattern.permute.xlu0 %v560
        %562 = vperm.xlu0 %561, %v545
        %v563 = vpop.permute.xlu0 %562
        %v564 = vlaneseq
        %v565 = vshrl.u32 %v564, 7
        %v566 = vadd.s32 %v565, 56
        %567 = vset.pattern.permute.xlu0 %v566
        %568 = vperm.xlu0 %567, %v545
        %v569 = vpop.permute.xlu0 %568
        %v570 = vlaneseq
        %v571 = vshrl.u32 %v570, 7
        %v572 = vadd.s32 %v571, 64
        %573 = vset.pattern.permute.xlu0 %v572
        %574 = vperm.xlu0 %573, %v545
        %v575 = vpop.permute.xlu0 %574
        %v576 = vlaneseq
        %v577 = vshrl.u32 %v576, 7
        %v578 = vadd.s32 %v577, 72
        %579 = vset.pattern.permute.xlu0 %v578
        %580 = vperm.xlu0 %579, %v545
        %v581 = vpop.permute.xlu0 %580
        %v582 = vlaneseq
        %v583 = vshrl.u32 %v582, 7
        %v584 = vadd.s32 %v583, 80
        %585 = vset.pattern.permute.xlu0 %v584
        %586 = vperm.xlu0 %585, %v545
        %v587 = vpop.permute.xlu0 %586
        %v588 = vlaneseq
        %v589 = vshrl.u32 %v588, 7
        %v590 = vadd.s32 %v589, 88
        %591 = vset.pattern.permute.xlu0 %v590
        %592 = vperm.xlu0 %591, %v545
        %v593 = vpop.permute.xlu0 %592
        %v594 = vmul.f32 %v551, %v336
        %v595 = vmul.f32 %v551, %v337
        %v596 = vmul.f32 %v557, %v338
        %v597 = vmul.f32 %v557, %v339
        %v598 = vmul.f32 %v563, %v340
        %v599 = vmul.f32 %v563, %v341
        %v600 = vmul.f32 %v569, %v342
        %v601 = vmul.f32 %v569, %v343
        %v602 = vadd.f32 %v594, %v575
        %v603 = vadd.f32 %v595, %v575
        %v604 = vadd.f32 %v596, %v581
        %v605 = vadd.f32 %v597, %v581
        %v606 = vadd.f32 %v598, %v587
        %v607 = vadd.f32 %v599, %v587
        %v608 = vadd.f32 %v600, %v593
        %v609 = vadd.f32 %v601, %v593
        %610 = vst [vmem:[%s335] sm:$0xff] %v602
        %611 = vst [vmem:[%s335 + $0x8] sm:$0xff] %v603
        %612 = vst [vmem:[%s335 + $0x10] sm:$0xff] %v604
        %613 = vst [vmem:[%s335 + $0x18] sm:$0xff] %v605
        %614 = vst [vmem:[%s335 + $0x20] sm:$0xff] %v606
        %615 = vst [vmem:[%s335 + $0x28] sm:$0xff] %v607
        %616 = vst [vmem:[%s335 + $0x30] sm:$0xff] %v608
        %617 = vst [vmem:[%s335 + $0x38] sm:$0xff] %v609
        %s618 = sand.u32 %s164, 1
        %s619 = scalar_lea.sflag [#allocation4], %s618
        %s620 = sand.u32 %s164, 1
        %s621 = smul.addr %s620, 64
        %s622 = scalar_lea.vmem [#allocation11], %s621
        // Predicated region
        $region65: #{tpu_custom_call.1} parent=43 // pred_check
          %p623 = pneg %p174
        $region66: #{tpu_custom_call.1} parent=43 // pred_check_branch
          %625 = sbr.rel (%p623) target = $region68
        $region67: #{tpu_custom_call.1} parent=43 // pred_region
          %627 = vsyncadd %s619, 0
          %s628 = smul.addr %s25, 8
          %s629 = smul.addr %s628, 8
          %s630 = scalar_lea.hbm %s6, %s629
          %s631 = sshll.u32 %s622, 4
          %s632 = int_to_ptr.vmem [resolvable:$true] %s631
          %s633 = sshll.u32 %s630, 4
          %s634 = int_to_ptr.hbm [resolvable:$true] %s633
          %639 = dma.vmem_to_hbm [thread:$0]  %s632, 1024, %s634, %s619, 256, 256, 16
        $region68: #{tpu_custom_call.1} parent=43 // pred_fallthru
          _
      $region44: #{tpu_custom_call.1} parent=5 // pred_fallthru
        _
      %p640 = scmp.le.s32.totalorder 2, %s20
      // Predicated region
      $region69: #{tpu_custom_call.1} parent=5 // pred_check
        %p641 = pneg %p640
      $region70: #{tpu_custom_call.1} parent=5 // pred_check_branch
        %643 = sbr.rel (%p641) target = $region72
      $region71: #{tpu_custom_call.1} parent=5 // pred_region
        %s644 = ssub.s32 %s20, 2
        // Predicated region
        $region73: #{tpu_custom_call.1} parent=71 // pred_check
          %p645 = pneg %p180
        $region74: #{tpu_custom_call.1} parent=71 // pred_check_branch
          %647 = sbr.rel (%p645) target = $region76
        $region75: #{tpu_custom_call.1} parent=71 // pred_region
          %s648 = sand.u32 %s165, 1
          %s649 = scalar_lea.sflag [#allocation4], %s648
          %s650 = sand.u32 %s165, 1
          %s651 = smul.addr %s650, 64
          %s652 = scalar_lea.vmem [#allocation11], %s651
          %654 = dma.done %s649, 1024
        $region76: #{tpu_custom_call.1} parent=71 // pred_fallthru
          _
      $region72: #{tpu_custom_call.1} parent=5 // pred_fallthru
        _
    $region6: #{tpu_custom_call.1} parent=1 // loop_footer
      %s24 = sadd.s32 1, %s20
    $region7: #{tpu_custom_call.1} parent=1 // loop_footer_branch
      %19 = sbr.rel target = $region3
    $region8: #{tpu_custom_call.1} parent=1 // loop_exit
      _
    %655 = vsyncpa [#allocation3], 1
    %s656 = scalar_lea.sflag [#allocation3], 1
    %657 = vsyncpa %s656, 1
    %658 = vsyncpa [#allocation6], 1
    %659 = vsyncpa [#allocation9], 1
    %660 = vsyncpa [#allocation4], 1
    %s661 = scalar_lea.sflag [#allocation4], 1
    %662 = vsyncpa %s661, 1

</llo_original>
